<compile_context>
chip_gen: v5e
topology: v5e:2x2
jax: 0.10.0
libtpu: 0.0.40
codegen_flags: <defaults>
</compile_context>

<pallas_src>
import functools
import math

import jax
import jax.numpy as jnp
from jax.experimental import pallas as pl
from jax.experimental.pallas import tpu as pltpu


_VMEM_BLOCK_BUDGET = 16 * 1024 * 1024   # budget for double-buffered in+out blocks
_VMEM_LIMIT = 32 * 1024 * 1024          # scoped VMEM request (safe on v5e/v6e/v7x)


def _se_scale(pooled_col, w1t, b1_row, w2, b2_col, negative_slope):
    """Bottleneck MLP + sigmoid, all in f32, column-oriented (C on sublanes).

    pooled_col: (C, 1)   w1t: (C, hidden)   b1_row: (1, hidden)
    w2: (C, hidden)      b2_col: (C, 1)     -> returns (C, 1) scale.
    """
    # linear1: h[j] = sum_c w1[j, c] * pooled[c] + b1[j]
    h = jnp.sum(w1t * pooled_col, axis=0, keepdims=True) + b1_row      # (1, hidden)
    # activation (relu / leakyrelu); negative_slope is a static Python float.
    h = jnp.maximum(h, 0.0) + negative_slope * jnp.minimum(h, 0.0)
    # linear2: logits[i] = sum_j w2[i, j] * h[j] + b2[i]
    logits = jnp.sum(w2 * h, axis=1, keepdims=True) + b2_col           # (C, 1)
    return 1.0 / (1.0 + jnp.exp(-logits))                              # (C, 1)


def _se_fused_kernel(x_ref, w1t_ref, b1_ref, w2_ref, b2_ref, o_ref, *,
                     inv_hw, negative_slope):
    """Single pass: pool + MLP + channel scale for one batch element."""
    x = x_ref[0].astype(jnp.float32)                                   # (C, S)
    pooled = jnp.sum(x, axis=-1, keepdims=True) * inv_hw               # (C, 1)
    scale = _se_scale(pooled,
                      w1t_ref[...].astype(jnp.float32),
                      b1_ref[...].astype(jnp.float32),
                      w2_ref[...].astype(jnp.float32),
                      b2_ref[...].astype(jnp.float32),
                      negative_slope)
    o_ref[0] = (x * scale).astype(o_ref.dtype)


def _pool_kernel(x_ref, o_ref, *, inv_hw):
    """Accumulate spatial sums per (batch, channel); finalize to the mean."""
    si = pl.program_id(1)

    @pl.when(si == 0)
    def _init():
        o_ref[...] = jnp.zeros_like(o_ref)

    o_ref[0] = o_ref[0] + jnp.sum(x_ref[0].astype(jnp.float32),
                                  axis=-1, keepdims=True)              # (C, 1)

    @pl.when(si == pl.num_programs(1) - 1)
    def _fin():
        o_ref[0] = o_ref[0] * inv_hw


def _se_apply_kernel(p_ref, w1t_ref, b1_ref, w2_ref, b2_ref, x_ref, o_ref, *,
                     negative_slope):
    """Compute the per-channel scale from the pooled vector and apply it."""
    pooled = p_ref[0].astype(jnp.float32)                              # (C, 1)
    scale = _se_scale(pooled,
                      w1t_ref[...].astype(jnp.float32),
                      b1_ref[...].astype(jnp.float32),
                      w2_ref[...].astype(jnp.float32),
                      b2_ref[...].astype(jnp.float32),
                      negative_slope)
    x = x_ref[0].astype(jnp.float32)                                   # (C, TS)
    o_ref[0] = (x * scale).astype(o_ref.dtype)


def _pick_spatial_tile(s, c, elem_bytes, budget_bytes):
    """Largest TS dividing S such that double-buffered (1, C, TS) in+out blocks
    stay within the VMEM block budget.  Prefers multiples of 128 (lane-dense)."""
    max_ts = max(1, budget_bytes // (4 * c * elem_bytes))
    if s <= max_ts:
        return s
    if s % 128 == 0 and max_ts >= 128:
        t = (max_ts // 128) * 128
        while t >= 128:
            if s % t == 0:
                return t
            t -= 128
    best = 1
    d = 1
    while d * d <= s:
        if s % d == 0:
            for cand in (d, s // d):
                if cand <= max_ts and cand > best:
                    best = cand
        d += 1
    return best


@functools.partial(jax.jit, static_argnames=("nonlinear", "block_budget_bytes"))
def self_attention_forward(x, w1, b1, w2, b2, nonlinear="relu",
                           block_budget_bytes=_VMEM_BLOCK_BUDGET):
    """Equivalent of SelfAttention.forward(x) for NCHW x.

    w1: (C//k, C), b1: (C//k,)  -- linear1 (PyTorch layout)
    w2: (C, C//k), b2: (C,)     -- linear2 (PyTorch layout)
    """
    if nonlinear == "relu":
        negative_slope = 0.0
    elif nonlinear == "leakyrelu":
        negative_slope = 0.2
    else:
        # TODO(synk): PReLU has a learnable slope parameter; not wired through here.
        raise ValueError(f"unsupported nonlinear: {nonlinear}")

    n, c, hh, ww = x.shape
    s = hh * ww
    hidden = w1.shape[0]

    x3 = x.reshape(n, c, s)            # free contiguous collapse; stays channel-major
    w1t = jnp.transpose(w1)            # (C, hidden) -- tiny, one-time
    b1r = b1.reshape(1, hidden)
    b2c = b2.reshape(c, 1)
    inv_hw = 1.0 / float(s)

    elem_bytes = 4                     # budget in f32 (kernel math is f32)
    full2d = lambda *_: (0, 0)
    fused_bytes = 4 * c * s * elem_bytes   # double-buffered x-in + out blocks

    if fused_bytes <= block_budget_bytes:
        # Fused path: one HBM read + one HBM write of x, everything else in VMEM.
        out3 = pl.pallas_call(
            functools.partial(_se_fused_kernel, inv_hw=inv_hw,
                              negative_slope=negative_slope),
            out_shape=jax.ShapeDtypeStruct((n, c, s), x.dtype),
            grid_spec=pltpu.PrefetchScalarGridSpec(
                num_scalar_prefetch=0,
                grid=(n,),
                in_specs=[
                    pl.BlockSpec((1, c, s), lambda ni: (ni, 0, 0)),
                    pl.BlockSpec((c, hidden), full2d),
                    pl.BlockSpec((1, hidden), full2d),
                    pl.BlockSpec((c, hidden), full2d),
                    pl.BlockSpec((c, 1), full2d),
                ],
                out_specs=pl.BlockSpec((1, c, s), lambda ni: (ni, 0, 0)),
            ),
            compiler_params=pltpu.CompilerParams(
                dimension_semantics=("parallel",),
                vmem_limit_bytes=_VMEM_LIMIT),
        )(x3, w1t, b1r, w2, b2c)
    else:
        # Tiled path: (1) pooled means, (2) scale + apply.  Lane-dense spatial tiles.
        ts = _pick_spatial_tile(s, c, elem_bytes, block_budget_bytes)
        n_s = s // ts

        pooled = pl.pallas_call(
            functools.partial(_pool_kernel, inv_hw=inv_hw),
            out_shape=jax.ShapeDtypeStruct((n, c, 1), jnp.float32),
            grid_spec=pltpu.PrefetchScalarGridSpec(
                num_scalar_prefetch=0,
                grid=(n, n_s),
                in_specs=[pl.BlockSpec((1, c, ts), lambda ni, si: (ni, 0, si))],
                out_specs=pl.BlockSpec((1, c, 1), lambda ni, si: (ni, 0, 0)),
            ),
            compiler_params=pltpu.CompilerParams(
                dimension_semantics=("parallel", "arbitrary"),
                vmem_limit_bytes=_VMEM_LIMIT),
        )(x3)

        out3 = pl.pallas_call(
            functools.partial(_se_apply_kernel, negative_slope=negative_slope),
            out_shape=jax.ShapeDtypeStruct((n, c, s), x.dtype),
            grid_spec=pltpu.PrefetchScalarGridSpec(
                num_scalar_prefetch=0,
                grid=(n, n_s),
                in_specs=[
                    pl.BlockSpec((1, c, 1), lambda ni, si: (ni, 0, 0)),
                    pl.BlockSpec((c, hidden), full2d),
                    pl.BlockSpec((1, hidden), full2d),
                    pl.BlockSpec((c, hidden), full2d),
                    pl.BlockSpec((c, 1), full2d),
                    pl.BlockSpec((1, c, ts), lambda ni, si: (ni, 0, si)),
                ],
                out_specs=pl.BlockSpec((1, c, ts), lambda ni, si: (ni, 0, si)),
            ),
            compiler_params=pltpu.CompilerParams(
                dimension_semantics=("parallel", "parallel"),
                vmem_limit_bytes=_VMEM_LIMIT),
        )(pooled, w1t, b1r, w2, b2c, x3)

    return out3.reshape(n, c, hh, ww)


def _reference(x, w1, b1, w2, b2, negative_slope):
    """Pure-JAX reference matching the PyTorch module."""
    xf = x.astype(jnp.float32)
    pooled = jnp.mean(xf, axis=(2, 3))                       # (N, C)
    h = pooled @ w1.astype(jnp.float32).T + b1.astype(jnp.float32)
    h = jnp.maximum(h, 0.0) + negative_slope * jnp.minimum(h, 0.0)
    logits = h @ w2.astype(jnp.float32).T + b2.astype(jnp.float32)
    scale = jax.nn.sigmoid(logits)                           # (N, C)
    return (xf * scale[:, :, None, None]).astype(x.dtype)


if __name__ == "__main__":
    key = jax.random.PRNGKey(0)
    N, C, H, W = 2, 4, 16, 16
    K = 2
    HID = C // K
    k1, k2, k3, k4, k5 = jax.random.split(key, 5)

    x = jax.random.normal(k1, (N, C, H, W), dtype=jnp.float32)
    lim1 = 1.0 / math.sqrt(C)
    w1 = jax.random.uniform(k2, (HID, C), minval=-lim1, maxval=lim1, dtype=jnp.float32)
    b1 = jax.random.uniform(k3, (HID,), minval=-lim1, maxval=lim1, dtype=jnp.float32)
    lim2 = 1.0 / math.sqrt(HID)
    w2 = jax.random.uniform(k4, (C, HID), minval=-lim2, maxval=lim2, dtype=jnp.float32)
    b2 = jax.random.uniform(k5, (C,), minval=-lim2, maxval=lim2, dtype=jnp.float32)

    # Fused single-pass path (default: per-batch slab fits the VMEM budget).
    out = jax.block_until_ready(
        self_attention_forward(x, w1, b1, w2, b2, nonlinear="relu"))
    ref = _reference(x, w1, b1, w2, b2, 0.0)
    assert out.shape == (N, C, H, W)
    assert jnp.max(jnp.abs(out - ref)) < 1e-4

    # LeakyReLU variant.
    out_l = jax.block_until_ready(
        self_attention_forward(x, w1, b1, w2, b2, nonlinear="leakyrelu"))
    ref_l = _reference(x, w1, b1, w2, b2, 0.2)
    assert jnp.max(jnp.abs(out_l - ref_l)) < 1e-4

    # Force the tiled (large-spatial) two-kernel path with a tiny block budget.
    out_t = jax.block_until_ready(
        self_attention_forward(x, w1, b1, w2, b2, nonlinear="relu",
                               block_budget_bytes=8 * 1024))
    assert jnp.max(jnp.abs(out_t - ref)) < 1e-4

    print("KERNEL_OK")
</pallas_src>

<mosaic_0001>
module attributes {stable_mosaic.version = 11 : i64} {
  func.func @_se_fused_kernel(%arg0: i32, %arg1: memref<1x4x256xf32, #tpu.memory_space<vmem>>, %arg2: memref<4x2xf32, #tpu.memory_space<vmem>>, %arg3: memref<1x2xf32, #tpu.memory_space<vmem>>, %arg4: memref<4x2xf32, #tpu.memory_space<vmem>>, %arg5: memref<4x1xf32, #tpu.memory_space<vmem>>, %arg6: memref<1x4x256xf32, #tpu.memory_space<vmem>>) attributes {dimension_semantics = [#tpu.dimension_semantics<parallel>], iteration_bounds = array<i64: 2>, scalar_prefetch = 0 : i64, scratch_operands = 0 : i64, tpu.core_type = #tpu.core_type<tc>, window_params = [{transform_indices = @transform_0, window_bounds = array<i64: 1, 4, 256>}, {pipeline_mode = #tpu.pipeline_mode<synchronous>, transform_indices = @transform_1, window_bounds = array<i64: 4, 2>}, {pipeline_mode = #tpu.pipeline_mode<synchronous>, transform_indices = @transform_2, window_bounds = array<i64: 1, 2>}, {pipeline_mode = #tpu.pipeline_mode<synchronous>, transform_indices = @transform_3, window_bounds = array<i64: 4, 2>}, {pipeline_mode = #tpu.pipeline_mode<synchronous>, transform_indices = @transform_4, window_bounds = array<i64: 4, 1>}, {transform_indices = @transform_5, window_bounds = array<i64: 1, 4, 256>}]} {
    %c0 = arith.constant 0 : index
    %c0_0 = arith.constant 0 : index
    %c0_1 = arith.constant 0 : index
    %0 = vector.load %arg1[%c0, %c0_0, %c0_1] : memref<1x4x256xf32, #tpu.memory_space<vmem>>, vector<1x4x256xf32>
    %1 = vector.shape_cast %0 : vector<1x4x256xf32> to vector<4x256xf32>
    %cst = arith.constant dense<0.000000e+00> : vector<4xf32>
    %2 = vector.multi_reduction <add>, %1, %cst [1] : vector<4x256xf32> to vector<4xf32>
    %3 = vector.shape_cast %2 : vector<4xf32> to vector<4x1xf32>
    %cst_2 = arith.constant 3.906250e-03 : f32
    %4 = vector.broadcast %cst_2 : f32 to vector<4x1xf32>
    %5 = arith.mulf %3, %4 : vector<4x1xf32>
    %c0_3 = arith.constant 0 : index
    %c0_4 = arith.constant 0 : index
    %6 = vector.load %arg2[%c0_3, %c0_4] : memref<4x2xf32, #tpu.memory_space<vmem>>, vector<4x2xf32>
    %c0_5 = arith.constant 0 : index
    %c0_6 = arith.constant 0 : index
    %7 = vector.load %arg3[%c0_5, %c0_6] : memref<1x2xf32, #tpu.memory_space<vmem>>, vector<1x2xf32>
    %c0_7 = arith.constant 0 : index
    %c0_8 = arith.constant 0 : index
    %8 = vector.load %arg4[%c0_7, %c0_8] : memref<4x2xf32, #tpu.memory_space<vmem>>, vector<4x2xf32>
    %c0_9 = arith.constant 0 : index
    %c0_10 = arith.constant 0 : index
    %9 = vector.load %arg5[%c0_9, %c0_10] : memref<4x1xf32, #tpu.memory_space<vmem>>, vector<4x1xf32>
    %10 = vector.broadcast %5 : vector<4x1xf32> to vector<4x2xf32>
    %11 = arith.mulf %6, %10 : vector<4x2xf32>
    %cst_11 = arith.constant dense<0.000000e+00> : vector<2xf32>
    %12 = vector.multi_reduction <add>, %11, %cst_11 [0] : vector<4x2xf32> to vector<2xf32>
    %13 = vector.shape_cast %12 : vector<2xf32> to vector<1x2xf32>
    %14 = arith.addf %13, %7 : vector<1x2xf32>
    %cst_12 = arith.constant 0.000000e+00 : f32
    %15 = vector.broadcast %cst_12 : f32 to vector<1x2xf32>
    %16 = arith.maximumf %14, %15 : vector<1x2xf32>
    %cst_13 = arith.constant 0.000000e+00 : f32
    %17 = vector.broadcast %cst_13 : f32 to vector<1x2xf32>
    %18 = arith.minimumf %14, %17 : vector<1x2xf32>
    %cst_14 = arith.constant 0.000000e+00 : f32
    %19 = vector.broadcast %cst_14 : f32 to vector<1x2xf32>
    %20 = arith.mulf %19, %18 : vector<1x2xf32>
    %21 = arith.addf %16, %20 : vector<1x2xf32>
    %22 = vector.broadcast %21 : vector<1x2xf32> to vector<4x2xf32>
    %23 = arith.mulf %8, %22 : vector<4x2xf32>
    %cst_15 = arith.constant dense<0.000000e+00> : vector<4xf32>
    %24 = vector.multi_reduction <add>, %23, %cst_15 [1] : vector<4x2xf32> to vector<4xf32>
    %25 = vector.shape_cast %24 : vector<4xf32> to vector<4x1xf32>
    %26 = arith.addf %25, %9 : vector<4x1xf32>
    %cst_16 = arith.constant 0.000000e+00 : f32
    %27 = vector.broadcast %cst_16 : f32 to vector<4x1xf32>
    %28 = arith.subf %27, %26 : vector<4x1xf32>
    %29 = math.exp %28 : vector<4x1xf32>
    %cst_17 = arith.constant 1.000000e+00 : f32
    %30 = vector.broadcast %cst_17 : f32 to vector<4x1xf32>
    %31 = arith.addf %30, %29 : vector<4x1xf32>
    %cst_18 = arith.constant 1.000000e+00 : f32
    %32 = vector.broadcast %cst_18 : f32 to vector<4x1xf32>
    %33 = arith.divf %32, %31 : vector<4x1xf32>
    %34 = vector.broadcast %33 : vector<4x1xf32> to vector<4x256xf32>
    %35 = arith.mulf %1, %34 : vector<4x256xf32>
    %c0_19 = arith.constant 0 : index
    %c0_20 = arith.constant 0 : index
    %c0_21 = arith.constant 0 : index
    %36 = vector.load %arg6[%c0_19, %c0_20, %c0_21] : memref<1x4x256xf32, #tpu.memory_space<vmem>>, vector<1x4x256xf32>
    %37 = vector.shape_cast %36 : vector<1x4x256xf32> to vector<4x256xf32>
    %38 = vector.shape_cast %35 : vector<4x256xf32> to vector<1x4x256xf32>
    tpu.vector_store %arg6[%c0_19, %c0_20, %c0_21], %38 {strides = array<i32>} : memref<1x4x256xf32, #tpu.memory_space<vmem>>, vector<1x4x256xf32>,
    return
  }
  func.func @transform_0(%arg0: i32) -> (i32, i32, i32) {
    %c0_i32 = arith.constant 0 : i32
    %c0_i32_0 = arith.constant 0 : i32
    %c0_i32_1 = arith.constant 0 : i32
    return %arg0, %c0_i32, %c0_i32_0 : i32, i32, i32
  }
  func.func @transform_1(%arg0: i32) -> (i32, i32) {
    %c0_i32 = arith.constant 0 : i32
    %c0_i32_0 = arith.constant 0 : i32
    %c0_i32_1 = arith.constant 0 : i32
    return %c0_i32, %c0_i32_0 : i32, i32
  }
  func.func @transform_2(%arg0: i32) -> (i32, i32) {
    %c0_i32 = arith.constant 0 : i32
    %c0_i32_0 = arith.constant 0 : i32
    %c0_i32_1 = arith.constant 0 : i32
    return %c0_i32, %c0_i32_0 : i32, i32
  }
  func.func @transform_3(%arg0: i32) -> (i32, i32) {
    %c0_i32 = arith.constant 0 : i32
    %c0_i32_0 = arith.constant 0 : i32
    %c0_i32_1 = arith.constant 0 : i32
    return %c0_i32, %c0_i32_0 : i32, i32
  }
  func.func @transform_4(%arg0: i32) -> (i32, i32) {
    %c0_i32 = arith.constant 0 : i32
    %c0_i32_0 = arith.constant 0 : i32
    %c0_i32_1 = arith.constant 0 : i32
    return %c0_i32, %c0_i32_0 : i32, i32
  }
  func.func @transform_5(%arg0: i32) -> (i32, i32, i32) {
    %c0_i32 = arith.constant 0 : i32
    %c0_i32_0 = arith.constant 0 : i32
    %c0_i32_1 = arith.constant 0 : i32
    return %arg0, %c0_i32, %c0_i32_0 : i32, i32, i32
  }
}

</mosaic_0001>

<llo_original>
// kernel: self_attention_forward.1
$region0: #{self_attention_forward.1}
  #allocation0 [shape = 'u32[]', space=smem, size = 0x4, offset = 0x4, fixed_abs, tag = 'smem constant byte address 0x4 - core index']
  #allocation1 [shape = 'u32[72,128]{1,0:T(1,128)}', space=vmem, size = 0x9000, scoped, tag = 'internal scratch']
  %s0 = inlined_call_operand.vmem [shape: f32[2,4,256], index: 0, kind: input, shape index: {}]
  %s1 = inlined_call_operand.vmem [shape: f32[4,2], index: 1, kind: input, shape index: {}]
  %s2 = inlined_call_operand.vmem [shape: f32[1,2], index: 2, kind: input, shape index: {}]
  %s3 = inlined_call_operand.vmem [shape: f32[4,2], index: 3, kind: input, shape index: {}]
  %s4 = inlined_call_operand.vmem [shape: f32[4,1], index: 4, kind: input, shape index: {}]
  %s5 = inlined_call_operand.vmem [shape: f32[2,4,256], index: 5, kind: output, shape index: {}]
  %s6 = sld [smem:[#allocation0]]
  $region53: #{self_attention_forward.1} parent=0
    _
  %s8 = ssub.s32 1, %s6
  %s9 = scalar_select 0, %s8, %s6
  loop: start=0, step=1, limit=4
  $region2: #{self_attention_forward.1} parent=0 // loop_pre_header
    _
  $region3: #{self_attention_forward.1} parent=0 // loop_header
    %s11 = sphi 0, %s15
    %p12 = scmp.ge.s32.totalorder %s11, 4
    %s21 = sphi 0, %s23
    %s24 = sphi 0, %s21
    %s25 = sphi 0, %s24
    %s41 = sphi 0, %s25
    %s45 = sphi 0, %s45
    %s47 = sphi 0, %s45
    %s48 = sphi 0, %s47
    %s62 = sphi 0, %s48
    %s66 = sphi 0, %s66
    %s68 = sphi 0, %s66
    %s69 = sphi 0, %s68
    %s83 = sphi 0, %s69
    %s87 = sphi 0, %s87
    %s89 = sphi 0, %s87
    %s90 = sphi 0, %s89
    %s104 = sphi 0, %s90
    %s108 = sphi 0, %s108
    %s110 = sphi 0, %s108
    %s111 = sphi 0, %s110
    %s125 = sphi 0, %s111
    %s131 = sphi 0, %s133
    %s134 = sphi 0, %s131
    %s135 = sphi 0, %s134
    %s151 = sphi 0, %s135
  $region4: #{self_attention_forward.1} parent=0 // loop_header_branch
    %14 = sbr.rel (%p12) target = $region8
  $region5: #{self_attention_forward.1} parent=0 // loop_body
    %s16 = ssub.s32 %s11, 1
    %s17 = ssub.s32 %s11, 2
    %s18 = sadd.s32 %s11, 1
    %s19 = ssub.s32 %s11, %s18
    %p20 = scmp.eq.s32.totalorder %s19, 0
    %s22 = sadd.s32 %s21, 1
    %s23 = scalar_select %p20, %s21, %s22
    %p26 = pneg %p20
    %p27 = scmp.eq.s32.totalorder %s11, 1
    %p28 = por %p26, %p27
    %p29 = scmp.ne.s32.totalorder %s21, %s24
    %p30 = scmp.eq.s32.totalorder %s11, 0
    %p31 = por %p29, %p30
    %p32 = scmp.ne.s32.totalorder %s21, %s24
    %p33 = scmp.eq.s32.totalorder %s16, 1
    %p34 = por %p32, %p33
    %p35 = scmp.ne.s32.totalorder %s24, %s25
    %p36 = scmp.eq.s32.totalorder %s16, 0
    %p37 = por %p35, %p36
    %p38 = scmp.ne.s32.totalorder %s24, %s25
    %p39 = scmp.eq.s32.totalorder %s17, 1
    %p40 = por %p38, %p39
    %p42 = scmp.ne.s32.totalorder %s25, %s41
    %p43 = scmp.eq.s32.totalorder %s17, 0
    %p44 = por %p42, %p43
    %s46 = sadd.s32 %s45, 1
    %p49 = scmp.eq.s32.totalorder %s11, 1
    %p50 = scmp.ne.s32.totalorder %s45, %s47
    %p51 = scmp.eq.s32.totalorder %s11, 0
    %p52 = por %p50, %p51
    %p53 = scmp.ne.s32.totalorder %s45, %s47
    %p54 = scmp.eq.s32.totalorder %s16, 1
    %p55 = por %p53, %p54
    %p56 = scmp.ne.s32.totalorder %s47, %s48
    %p57 = scmp.eq.s32.totalorder %s16, 0
    %p58 = por %p56, %p57
    %p59 = scmp.ne.s32.totalorder %s47, %s48
    %p60 = scmp.eq.s32.totalorder %s17, 1
    %p61 = por %p59, %p60
    %p63 = scmp.ne.s32.totalorder %s48, %s62
    %p64 = scmp.eq.s32.totalorder %s17, 0
    %p65 = por %p63, %p64
    %s67 = sadd.s32 %s66, 1
    %p70 = scmp.eq.s32.totalorder %s11, 1
    %p71 = scmp.ne.s32.totalorder %s66, %s68
    %p72 = scmp.eq.s32.totalorder %s11, 0
    %p73 = por %p71, %p72
    %p74 = scmp.ne.s32.totalorder %s66, %s68
    %p75 = scmp.eq.s32.totalorder %s16, 1
    %p76 = por %p74, %p75
    %p77 = scmp.ne.s32.totalorder %s68, %s69
    %p78 = scmp.eq.s32.totalorder %s16, 0
    %p79 = por %p77, %p78
    %p80 = scmp.ne.s32.totalorder %s68, %s69
    %p81 = scmp.eq.s32.totalorder %s17, 1
    %p82 = por %p80, %p81
    %p84 = scmp.ne.s32.totalorder %s69, %s83
    %p85 = scmp.eq.s32.totalorder %s17, 0
    %p86 = por %p84, %p85
    %s88 = sadd.s32 %s87, 1
    %p91 = scmp.eq.s32.totalorder %s11, 1
    %p92 = scmp.ne.s32.totalorder %s87, %s89
    %p93 = scmp.eq.s32.totalorder %s11, 0
    %p94 = por %p92, %p93
    %p95 = scmp.ne.s32.totalorder %s87, %s89
    %p96 = scmp.eq.s32.totalorder %s16, 1
    %p97 = por %p95, %p96
    %p98 = scmp.ne.s32.totalorder %s89, %s90
    %p99 = scmp.eq.s32.totalorder %s16, 0
    %p100 = por %p98, %p99
    %p101 = scmp.ne.s32.totalorder %s89, %s90
    %p102 = scmp.eq.s32.totalorder %s17, 1
    %p103 = por %p101, %p102
    %p105 = scmp.ne.s32.totalorder %s90, %s104
    %p106 = scmp.eq.s32.totalorder %s17, 0
    %p107 = por %p105, %p106
    %s109 = sadd.s32 %s108, 1
    %p112 = scmp.eq.s32.totalorder %s11, 1
    %p113 = scmp.ne.s32.totalorder %s108, %s110
    %p114 = scmp.eq.s32.totalorder %s11, 0
    %p115 = por %p113, %p114
    %p116 = scmp.ne.s32.totalorder %s108, %s110
    %p117 = scmp.eq.s32.totalorder %s16, 1
    %p118 = por %p116, %p117
    %p119 = scmp.ne.s32.totalorder %s110, %s111
    %p120 = scmp.eq.s32.totalorder %s16, 0
    %p121 = por %p119, %p120
    %p122 = scmp.ne.s32.totalorder %s110, %s111
    %p123 = scmp.eq.s32.totalorder %s17, 1
    %p124 = por %p122, %p123
    %p126 = scmp.ne.s32.totalorder %s111, %s125
    %p127 = scmp.eq.s32.totalorder %s17, 0
    %p128 = por %p126, %p127
    %s129 = ssub.s32 %s11, %s18
    %p130 = scmp.eq.s32.totalorder %s129, 0
    %s132 = sadd.s32 %s131, 1
    %s133 = scalar_select %p130, %s131, %s132
    %p136 = pneg %p130
    %p137 = scmp.eq.s32.totalorder %s11, 1
    %p138 = por %p136, %p137
    %p139 = scmp.ne.s32.totalorder %s131, %s134
    %p140 = scmp.eq.s32.totalorder %s11, 0
    %p141 = por %p139, %p140
    %p142 = scmp.ne.s32.totalorder %s131, %s134
    %p143 = scmp.eq.s32.totalorder %s16, 1
    %p144 = por %p142, %p143
    %p145 = scmp.ne.s32.totalorder %s134, %s135
    %p146 = scmp.eq.s32.totalorder %s16, 0
    %p147 = por %p145, %p146
    %p148 = scmp.ne.s32.totalorder %s134, %s135
    %p149 = scmp.eq.s32.totalorder %s17, 1
    %p150 = por %p148, %p149
    %p152 = scmp.ne.s32.totalorder %s135, %s151
    %p153 = scmp.eq.s32.totalorder %s17, 0
    %p154 = por %p152, %p153
    %p155 = scmp.le.s32.totalorder 1, %s11
    %p156 = scmp.lt.s32.totalorder %s11, 3
    %p157 = pnand %p155, %p156
    %p158 = pneg %p157
    // Predicated region
    $region9: #{self_attention_forward.1} parent=5 // pred_check
      _
    $region10: #{self_attention_forward.1} parent=5 // pred_check_branch
      %160 = sbr.rel (%p157) target = $region12
    $region11: #{self_attention_forward.1} parent=5 // pred_region
      %s161 = ssub.s32 %s11, 1
      // Predicated region
      $region13: #{self_attention_forward.1} parent=11 // pred_check
        %p162 = pneg %p58
      $region14: #{self_attention_forward.1} parent=11 // pred_check_branch
        %164 = sbr.rel (%p162) target = $region16
      $region15: #{self_attention_forward.1} parent=11 // pred_region
        _
      $region16: #{self_attention_forward.1} parent=11 // pred_fallthru
        _
      // Predicated region
      $region17: #{self_attention_forward.1} parent=11 // pred_check
        %p165 = pneg %p79
      $region18: #{self_attention_forward.1} parent=11 // pred_check_branch
        %167 = sbr.rel (%p165) target = $region20
      $region19: #{self_attention_forward.1} parent=11 // pred_region
        _
      $region20: #{self_attention_forward.1} parent=11 // pred_fallthru
        _
      // Predicated region
      $region21: #{self_attention_forward.1} parent=11 // pred_check
        %p168 = pneg %p100
      $region22: #{self_attention_forward.1} parent=11 // pred_check_branch
        %170 = sbr.rel (%p168) target = $region24
      $region23: #{self_attention_forward.1} parent=11 // pred_region
        _
      $region24: #{self_attention_forward.1} parent=11 // pred_fallthru
        _
      // Predicated region
      $region25: #{self_attention_forward.1} parent=11 // pred_check
        %p171 = pneg %p121
      $region26: #{self_attention_forward.1} parent=11 // pred_check_branch
        %173 = sbr.rel (%p171) target = $region28
      $region27: #{self_attention_forward.1} parent=11 // pred_region
        _
      $region28: #{self_attention_forward.1} parent=11 // pred_fallthru
        _
    $region12: #{self_attention_forward.1} parent=5 // pred_fallthru
      _
    %p174 = scmp.lt.s32.totalorder %s11, 2
    // Predicated region
    $region29: #{self_attention_forward.1} parent=5 // pred_check
      %p175 = pneg %p174
    $region30: #{self_attention_forward.1} parent=5 // pred_check_branch
      %177 = sbr.rel (%p175) target = $region32
    $region31: #{self_attention_forward.1} parent=5 // pred_region
      // Predicated region
      $region33: #{self_attention_forward.1} parent=31 // pred_check
        %p178 = pneg %p31
      $region34: #{self_attention_forward.1} parent=31 // pred_check_branch
        %180 = sbr.rel (%p178) target = $region36
      $region35: #{self_attention_forward.1} parent=31 // pred_region
        %p181 = scmp.lt.s32.totalorder %s11, 1
        %s182 = scalar_select %p181, %s11, 1
        %s183 = smul.addr %s182, 2
        %s184 = smul.addr %s183, 4
        %s185 = scalar_lea.vmem %s0, %s184
      $region36: #{self_attention_forward.1} parent=31 // pred_fallthru
        _
    $region32: #{self_attention_forward.1} parent=5 // pred_fallthru
      _
    %p186 = scmp.le.s32.totalorder 1, %s11
    %p187 = scmp.lt.s32.totalorder %s11, 3
    %p188 = pnand %p186, %p187
    %p189 = pneg %p188
    // Predicated region
    $region37: #{self_attention_forward.1} parent=5 // pred_check
      _
    $region38: #{self_attention_forward.1} parent=5 // pred_check_branch
      %191 = sbr.rel (%p188) target = $region40
    $region39: #{self_attention_forward.1} parent=5 // pred_region
      %s192 = ssub.s32 %s11, 1
      %p193 = scmp.lt.s32.totalorder %s16, 1
      %s194 = scalar_select %p193, %s16, 1
      %s195 = smul.addr %s194, 2
      %s196 = smul.addr %s195, 4
      %s197 = scalar_lea.vmem %s0, %s196
      %p198 = pneg %p37
      %p199 = pneg %p34
      %p200 = pneg %p58
      %p201 = pneg %p55
      %p202 = pneg %p79
      %p203 = pneg %p76
      %p204 = pneg %p100
      %p205 = pneg %p97
      %p206 = pneg %p121
      %p207 = pneg %p118
      %p208 = pneg %p147
      %p209 = pneg %p144
      %p210 = scmp.lt.s32.totalorder %s16, 1
      %s211 = scalar_select %p210, %s16, 1
      %s212 = smul.addr %s211, 2
      %s213 = smul.addr %s212, 4
      %s214 = scalar_lea.vmem %s5, %s213
      %p215 = scmp.lt.s32.totalorder %s16, 1
      %s216 = scalar_select %p215, %s16, 1
      %s217 = smul.addr %s216, 2
      %s218 = smul.addr %s217, 4
      %s219 = scalar_lea.vmem %s0, %s218
      %p220 = scmp.lt.s32.totalorder %s16, 1
      %s221 = scalar_select %p220, %s16, 1
      %s222 = smul.addr %s221, 2
      %s223 = smul.addr %s222, 4
      %s224 = scalar_lea.vmem %s5, %s223
      %v225 = vld [vmem:[%s219] sm:$0xff]
      %227 = vst [vmem:[#allocation1] ss:$2 sm:$0xff] %v225
      %v228 = vld.sshfl [vmem:[#allocation1] sm:$0xff pattern:$0x75316420]
      %v229 = vld.sshfl [vmem:[#allocation1 + $0x8] sm:$0xff pattern:$0x75316420]
      %vm232 = vcmask 1043456
      %v233 = vsel %vm232, %v228, 0.0
      %v234 = vsel %vm232, %v229, 0.0
      %v235 = vadd.f32 %v233, %v234
      %236 = vadd.xlane.f32.xlu0 %v235
      %v237 = vpop.xlane.xlu0 %236
      %v238 = vmul.f32 %v237, 0.00390625
      %v239 = vld [vmem:[%s1] sm:$0xf]
      %v240 = vld [vmem:[%s2] sm:$0x1]
      %v241 = vld [vmem:[%s3] sm:$0xf]
      %v242 = vld [vmem:[%s4] sm:$0xf]
      %v243 = vmul.f32 %v239, %v238
      %vm244 = vcmask 11264
      %v245 = vsel %vm244, %v243, 0.0
      %v246 = vrot.slane %v245, 4
      %v247 = vadd.f32 %v245, %v246
      %v248 = vrot.slane %v247, 2
      %v249 = vadd.f32 %v247, %v248
      %v250 = vrot.slane %v249, 1
      %v251 = vadd.f32 %v249, %v250
      %v252 = vadd.f32 %v251, %v240
      %v253 = vmax.f32 %v252, 0.0
      %v254 = vmin.f32 %v252, 0.0
      %v255 = vmul.f32 %v254, 0.0
      %v256 = vadd.f32 %v253, %v255
      %v257 = vperm.slane %v256, 0
      %v258 = vmul.f32 %v241, %v257
      %v259 = vsel %vm244, %v258, 0.0
      %260 = vadd.xlane.f32.xlu0 %v259
      %v261 = vpop.xlane.xlu0 %260
      %v262 = vadd.f32 %v261, %v242
      %v263 = vsub.f32 0.0, %v262
      %v264 = vmul.f32 %v263, 1.442695
      %v265 = vpow.pop %v264
      %v266 = vadd.f32 %v265, 1.0
      %v267 = vrcp.pop %v266
      %v268 = vmul.f32 %v266, %v267
      %v269 = vsub.f32 1.0, %v268
      %v270 = vmul.f32 %v267, %v269
      %v271 = vadd.f32 %v267, %v270
      %vm272 = vweird.f32 %v266
      %vm273 = vweird.f32 %v267
      %vm274 = vmor %vm272, %vm273
      %v275 = vsel %vm274, %v267, %v271
      %v276 = vand.u32 2147483647, %v266
      %vm277 = vcmp.eq.f32.partialorder %v276, 8.507059e+37
      %v278 = vand.u32 %v266, 2147483648
      %v279 = vor.u32 1.1754944e-38, %v278
      %v280 = vsel %vm277, %v279, %v275
      %v281 = vmul.f32 1.0, %v280
      %283 = vset.pattern.permute.xlu0 0
      %284 = vperm.xlu0 %283, %v281
      %v285 = vpop.permute.xlu0 %284
      %v287 = vunpack.c.l.s4 839922192
      %v288 = vunpack.c.0.s8 %v287
      %v289 = vperm.slane %v285, %v288
      %v291 = vmul.f32 %v225, %v289
      %292 = vst [vmem:[%s224] sm:$0xff] %v291
      %p293 = scmp.lt.s32.totalorder %s16, 1
      %s294 = scalar_select %p293, %s16, 1
      %s295 = smul.addr %s294, 2
      %s296 = smul.addr %s295, 4
      %s297 = scalar_lea.vmem %s5, %s296
      // Predicated region
      $region41: #{self_attention_forward.1} parent=39 // pred_check
        %p298 = pneg %p144
      $region42: #{self_attention_forward.1} parent=39 // pred_check_branch
        %300 = sbr.rel (%p298) target = $region44
      $region43: #{self_attention_forward.1} parent=39 // pred_region
        _
      $region44: #{self_attention_forward.1} parent=39 // pred_fallthru
        _
    $region40: #{self_attention_forward.1} parent=5 // pred_fallthru
      _
    %p301 = scmp.le.s32.totalorder 2, %s11
    // Predicated region
    $region45: #{self_attention_forward.1} parent=5 // pred_check
      %p302 = pneg %p301
    $region46: #{self_attention_forward.1} parent=5 // pred_check_branch
      %304 = sbr.rel (%p302) target = $region48
    $region47: #{self_attention_forward.1} parent=5 // pred_region
      %s305 = ssub.s32 %s11, 2
      // Predicated region
      $region49: #{self_attention_forward.1} parent=47 // pred_check
        %p306 = pneg %p150
      $region50: #{self_attention_forward.1} parent=47 // pred_check_branch
        %308 = sbr.rel (%p306) target = $region52
      $region51: #{self_attention_forward.1} parent=47 // pred_region
        %p309 = scmp.lt.s32.totalorder %s17, 1
        %s310 = scalar_select %p309, %s17, 1
        %s311 = smul.addr %s310, 2
        %s312 = smul.addr %s311, 4
        %s313 = scalar_lea.vmem %s5, %s312
      $region52: #{self_attention_forward.1} parent=47 // pred_fallthru
        _
    $region48: #{self_attention_forward.1} parent=5 // pred_fallthru
      _
  $region6: #{self_attention_forward.1} parent=0 // loop_footer
    %s15 = sadd.s32 1, %s11
  $region7: #{self_attention_forward.1} parent=0 // loop_footer_branch
    %10 = sbr.rel target = $region3
  $region8: #{self_attention_forward.1} parent=0 // loop_exit
    _

</llo_original>
